<compile_context>
chip_gen: v6e
topology: v6e:2x2x1
jax: 0.10.0
libtpu: 0.0.40
codegen_flags: <defaults>
</compile_context>

<pallas_src>
import functools

import jax
import jax.numpy as jnp
from jax import lax
from jax.experimental import pallas as pl
from jax.experimental.pallas import tpu as pltpu


def word2vec_kernel(e_ref, w_ref, logits_ref):
    # e_ref      : VMEM (tb, D)    batch tile of gathered embeddings
    # w_ref      : VMEM (tv, D)    vocab tile of expand weight
    # logits_ref : VMEM (tb, tv)   output tile (f32)
    logits_ref[...] = lax.dot_general(
        e_ref[...],
        w_ref[...],
        dimension_numbers=(((1,), (1,)), ((), ())),  # e @ w.T without explicit .T
        preferred_element_type=jnp.float32,
    )


def _round_up(x, m):
    return ((x + m - 1) // m) * m


@functools.partial(jax.jit, static_argnames=("tv", "tb", "stream_bf16"))
def word2vec_forward(x, emb_weight, expand_weight, *, tv=2048, tb=256,
                     stream_bf16=False):
    """Returns (logits, e) matching Word2vecModel.forward."""
    B = x.shape[0]
    V, D = emb_weight.shape
    assert expand_weight.shape == (V, D)

    stream_dtype = jnp.bfloat16 if stream_bf16 else jnp.float32
    sublane = 16 if stream_bf16 else 8

    # --- batch padding / tiling -------------------------------------------
    # Pad token ids (with a valid index) and gather B_pad rows directly; the
    # extra rows are sliced off the logits at the end.
    B_pad = max(sublane, _round_up(B, sublane))
    ids = x.astype(jnp.int32)
    if B_pad != B:
        ids = jnp.concatenate([ids, jnp.zeros((B_pad - B,), jnp.int32)])
    e_pad = jnp.take(emb_weight, ids, axis=0)              # (B_pad, D) f32
    e = e_pad[:B]                                           # returned as-is (f32)

    tb = min(tb, B_pad)                                     # multiple of sublane

    # --- vocab tiling -------------------------------------------------------
    # tv must be a multiple of 128 (lane dim of the output block); clamp to a
    # 128-rounded vocab size so tiny vocabs still compile.
    tv = min(tv, _round_up(V, 128))
    tv = _round_up(tv, 128)

    nv = pl.cdiv(V, tv)
    nb = pl.cdiv(B_pad, tb)
    grid = (nv, nb)  # vocab outer (weight streamed once), batch inner

    w_stream = expand_weight.astype(stream_dtype)
    e_stream = e_pad.astype(stream_dtype)

    # --- VMEM budget: size to actual usage, not the whole chip --------------
    we = jnp.dtype(stream_dtype).itemsize
    needed = (2 * tv * D * we          # double-buffered weight tile
              + 2 * tb * tv * 4        # double-buffered f32 output tile
              + 2 * tb * D * we)       # double-buffered e tile
    vmem_limit = int(min(max(needed + (8 << 20), 16 << 20), 64 << 20))

    cost = pl.CostEstimate(
        flops=2 * B_pad * D * V,
        transcendentals=0,
        bytes_accessed=V * D * we + B_pad * V * 4 + nv * B_pad * D * we,
    )

    logits_pad = pl.pallas_call(
        word2vec_kernel,
        out_shape=jax.ShapeDtypeStruct((B_pad, V), jnp.float32),
        grid=grid,
        in_specs=[
            # batch tile of e: index only changes on the inner (batch) axis,
            # so with a single batch tile it stays resident in VMEM.
            pl.BlockSpec((tb, D), lambda vj, bi: (bi, 0)),
            # one vocab tile of the expand weight per outer step
            # (streamed from HBM exactly once for the whole batch).
            pl.BlockSpec((tv, D), lambda vj, bi: (vj, 0)),
        ],
        out_specs=pl.BlockSpec((tb, tv), lambda vj, bi: (bi, vj)),
        compiler_params=pltpu.CompilerParams(
            dimension_semantics=("parallel", "parallel"),
            vmem_limit_bytes=vmem_limit,
        ),
        cost_estimate=cost,
    )(e_stream, w_stream)

    return logits_pad[:B], e


if __name__ == "__main__":
    key = jax.random.PRNGKey(0)

    def make_case(k, batch, vocab_size, embedding_size):
        k_ids, k_emb, k_exp = jax.random.split(k, 3)
        x = jax.random.randint(k_ids, (batch,), 0, vocab_size, dtype=jnp.int32)
        init_w = 0.5 / embedding_size
        emb_weight = jax.random.uniform(
            k_emb, (vocab_size, embedding_size), jnp.float32, -init_w, init_w)
        bound = 1.0 / (embedding_size ** 0.5)
        expand_weight = jax.random.uniform(
            k_exp, (vocab_size, embedding_size), jnp.float32, -bound, bound)
        return x, emb_weight, expand_weight

    k1, k2 = jax.random.split(key)

    # Case 1: small, aligned shapes (matches the module defaults).
    x, emb_w, exp_w = make_case(k1, batch=8, vocab_size=256, embedding_size=128)
    logits, e = word2vec_forward(x, emb_w, exp_w)
    jax.block_until_ready((logits, e))
    e_ref = emb_w[x]
    logits_ref = e_ref @ exp_w.T
    assert logits.shape == (8, 256) and e.shape == (8, 128)
    assert jnp.allclose(e, e_ref, atol=1e-6), "embedding mismatch (case 1)"
    assert jnp.allclose(logits, logits_ref, atol=1e-4, rtol=1e-4), "logits mismatch (case 1)"

    # Case 2: ragged shapes (batch not multiple of 8, vocab not multiple of 128)
    # exercising the cdiv grid / masked boundary blocks.
    x2, emb_w2, exp_w2 = make_case(k2, batch=5, vocab_size=200, embedding_size=128)
    logits2, e2 = word2vec_forward(x2, emb_w2, exp_w2)
    jax.block_until_ready((logits2, e2))
    e2_ref = emb_w2[x2]
    logits2_ref = e2_ref @ exp_w2.T
    assert logits2.shape == (5, 200) and e2.shape == (5, 128)
    assert jnp.allclose(e2, e2_ref, atol=1e-6), "embedding mismatch (case 2)"
    assert jnp.allclose(logits2, logits2_ref, atol=1e-4, rtol=1e-4), "logits mismatch (case 2)"

    print("KERNEL_OK")
</pallas_src>

<mosaic_0001>
module attributes {stable_mosaic.version = 11 : i64} {
  func.func @word2vec_kernel(%arg0: i32, %arg1: i32, %arg2: memref<8x128xf32, #tpu.memory_space<vmem>>, %arg3: memref<256x128xf32, #tpu.memory_space<vmem>>, %arg4: memref<8x256xf32, #tpu.memory_space<vmem>>) attributes {dimension_semantics = [#tpu.dimension_semantics<parallel>, #tpu.dimension_semantics<parallel>], iteration_bounds = array<i64: 1, 1>, scalar_prefetch = 0 : i64, scratch_operands = 0 : i64, tpu.core_type = #tpu.core_type<tc>, window_params = [{transform_indices = @transform_0, window_bounds = array<i64: 8, 128>}, {transform_indices = @transform_1, window_bounds = array<i64: 256, 128>}, {transform_indices = @transform_2, window_bounds = array<i64: 8, 256>}]} {
    %c0 = arith.constant 0 : index
    %c0_0 = arith.constant 0 : index
    %0 = vector.load %arg2[%c0, %c0_0] : memref<8x128xf32, #tpu.memory_space<vmem>>, vector<8x128xf32>
    %c0_1 = arith.constant 0 : index
    %c0_2 = arith.constant 0 : index
    %1 = vector.load %arg3[%c0_1, %c0_2] : memref<256x128xf32, #tpu.memory_space<vmem>>, vector<256x128xf32>
    %cst = arith.constant dense<0.000000e+00> : vector<8x256xf32>
    %2 = tpu.matmul %0, %1, %cst {dimension_numbers = #tpu.dot_dimension_numbers<[1], [1], [0], [0], [0, 0, 1, 0], [], []>} : vector<8x128xf32>, vector<256x128xf32>, vector<8x256xf32> -> vector<8x256xf32>
    %c0_3 = arith.constant 0 : index
    %c0_4 = arith.constant 0 : index
    %3 = vector.load %arg4[%c0_3, %c0_4] : memref<8x256xf32, #tpu.memory_space<vmem>>, vector<8x256xf32>
    tpu.vector_store %arg4[%c0_3, %c0_4], %2 {strides = array<i32>} : memref<8x256xf32, #tpu.memory_space<vmem>>, vector<8x256xf32>,
    return
  }
  func.func @transform_0(%arg0: i32, %arg1: i32) -> (i32, i32) {
    %c0_i32 = arith.constant 0 : i32
    %c0_i32_0 = arith.constant 0 : i32
    return %arg1, %c0_i32 : i32, i32
  }
  func.func @transform_1(%arg0: i32, %arg1: i32) -> (i32, i32) {
    %c0_i32 = arith.constant 0 : i32
    %c0_i32_0 = arith.constant 0 : i32
    return %arg0, %c0_i32 : i32, i32
  }
  func.func @transform_2(%arg0: i32, %arg1: i32) -> (i32, i32) {
    %c0_i32 = arith.constant 0 : i32
    return %arg1, %arg0 : i32, i32
  }
}

</mosaic_0001>

<llo_original>
// kernel: word2vec_forward.1
$region0: #{word2vec_forward.1}
  #allocation0 [shape = 'u32[]', space=smem, size = 0x4, offset = 0x4, fixed_abs, tag = 'smem constant byte address 0x4 - core index']
  #allocation1 [shape = 'u32[144,128]{1,0:T(1,128)}', space=vmem, size = 0x12000, scoped, tag = 'internal scratch']
  %s0 = inlined_call_operand.vmem [shape: f32[8,128], index: 0, kind: input, shape index: {}]
  %s1 = inlined_call_operand.hbm [shape: f32[256,128], index: 1, kind: input, shape index: {}]
  %s2 = inlined_call_operand.hbm [shape: f32[8,256], index: 2, kind: output, shape index: {}]
  %s3 = sld [smem:[#allocation0]]
  $region22: #{word2vec_forward.1} parent=0
    _
  %s5 = ssub.s32 1, %s3
  %s6 = scalar_select 0, %s5, %s3
  $region1: #{word2vec_forward.1} parent=0
    #allocation2 [shape = 'u8[131072]{0}', space=vmem, size = 0x20000, scoped, tag = 'input window, operand 1, single buffered']
    #allocation3 [shape = 's32[1]{0}', space=sflag, size = 0x4, scoped, tag = 'scoped memory for word2vec_forward.1']
    #allocation4 [shape = 's32[1]{0}', space=sflag, size = 0x4, scoped, tag = 'scoped memory for word2vec_forward.1']
    #allocation5 [shape = 'u8[8192]{0}', space=vmem, size = 0x2000, scoped, tag = 'output window, operand 0, single buffered']
    %7 = vsyncpa [#allocation3], 0
    %8 = vsyncpa [#allocation4], 0
    // Predicated region
    $region2: #{word2vec_forward.1} parent=1 // pred_check
      _
    $region3: #{word2vec_forward.1} parent=1 // pred_check_branch
      %10 = sbr.rel (0) target = $region5
    $region4: #{word2vec_forward.1} parent=1 // pred_region
      _
    $region5: #{word2vec_forward.1} parent=1 // pred_fallthru
      _
    // Predicated region
    $region6: #{word2vec_forward.1} parent=1 // pred_check
      _
    $region7: #{word2vec_forward.1} parent=1 // pred_check_branch
      %12 = sbr.rel (0) target = $region9
    $region8: #{word2vec_forward.1} parent=1 // pred_region
      %s14 = ssub.s32 4096, 4096
      %15 = vsyncadd [#allocation3], %s14
      %s16 = sshll.u32 [#allocation2], 4
      %s17 = int_to_ptr.vmem [resolvable:$true] %s16
      %22 = dma.hbm_to_vmem [thread:$0]  %s1, 4096, %s17, [#allocation3], 128, 128, 8
    $region9: #{word2vec_forward.1} parent=1 // pred_fallthru
      _
    // Predicated region
    $region10: #{word2vec_forward.1} parent=1 // pred_check
      _
    $region11: #{word2vec_forward.1} parent=1 // pred_check_branch
      %24 = sbr.rel (0) target = $region13
    $region12: #{word2vec_forward.1} parent=1 // pred_region
      %25 = dma.done [#allocation3], 4096
    $region13: #{word2vec_forward.1} parent=1 // pred_fallthru
      _
    %v26 = vld [vmem:[%s0] sm:$0xff]
    %v27 = vld [vmem:[#allocation2] sm:$0xff]
    %v28 = vld [vmem:[#allocation2 + $0x8] sm:$0xff]
    %v29 = vld [vmem:[#allocation2 + $0x10] sm:$0xff]
    %v30 = vld [vmem:[#allocation2 + $0x18] sm:$0xff]
    %v31 = vld [vmem:[#allocation2 + $0x20] sm:$0xff]
    %v32 = vld [vmem:[#allocation2 + $0x28] sm:$0xff]
    %v33 = vld [vmem:[#allocation2 + $0x30] sm:$0xff]
    %v34 = vld [vmem:[#allocation2 + $0x38] sm:$0xff]
    %v35 = vld [vmem:[#allocation2 + $0x40] sm:$0xff]
    %v36 = vld [vmem:[#allocation2 + $0x48] sm:$0xff]
    %v37 = vld [vmem:[#allocation2 + $0x50] sm:$0xff]
    %v38 = vld [vmem:[#allocation2 + $0x58] sm:$0xff]
    %v39 = vld [vmem:[#allocation2 + $0x60] sm:$0xff]
    %v40 = vld [vmem:[#allocation2 + $0x68] sm:$0xff]
    %v41 = vld [vmem:[#allocation2 + $0x70] sm:$0xff]
    %v42 = vld [vmem:[#allocation2 + $0x78] sm:$0xff]
    %v43 = vld [vmem:[#allocation2 + $0x80] sm:$0xff]
    %v44 = vld [vmem:[#allocation2 + $0x88] sm:$0xff]
    %v45 = vld [vmem:[#allocation2 + $0x90] sm:$0xff]
    %v46 = vld [vmem:[#allocation2 + $0x98] sm:$0xff]
    %v47 = vld [vmem:[#allocation2 + $0xa0] sm:$0xff]
    %v48 = vld [vmem:[#allocation2 + $0xa8] sm:$0xff]
    %v49 = vld [vmem:[#allocation2 + $0xb0] sm:$0xff]
    %v50 = vld [vmem:[#allocation2 + $0xb8] sm:$0xff]
    %v51 = vld [vmem:[#allocation2 + $0xc0] sm:$0xff]
    %v52 = vld [vmem:[#allocation2 + $0xc8] sm:$0xff]
    %v53 = vld [vmem:[#allocation2 + $0xd0] sm:$0xff]
    %v54 = vld [vmem:[#allocation2 + $0xd8] sm:$0xff]
    %v55 = vld [vmem:[#allocation2 + $0xe0] sm:$0xff]
    %v56 = vld [vmem:[#allocation2 + $0xe8] sm:$0xff]
    %v57 = vld [vmem:[#allocation2 + $0xf0] sm:$0xff]
    %v58 = vld [vmem:[#allocation2 + $0xf8] sm:$0xff]
    %59 = vmatprep.subr.mxu0 0.0
    %60 = vmatpush1.xpose.msra.mxu0 %v42
    %61 = vmatprep.subr.mxu0 0.0
    %62 = vmatpush1.xpose.msra.mxu0 %v41
    %63 = vmatprep.subr.mxu0 0.0
    %64 = vmatpush1.xpose.msra.mxu0 %v40
    %65 = vmatprep.subr.mxu0 0.0
    %66 = vmatpush1.xpose.msra.mxu0 %v39
    %67 = vmatprep.subr.mxu0 0.0
    %68 = vmatpush1.xpose.msra.mxu0 %v38
    %69 = vmatprep.subr.mxu0 0.0
    %70 = vmatpush1.xpose.msra.mxu0 %v37
    %71 = vmatprep.subr.mxu0 0.0
    %72 = vmatpush1.xpose.msra.mxu0 %v36
    %73 = vmatprep.subr.mxu0 0.0
    %74 = vmatpush1.xpose.msra.mxu0 %v35
    %75 = vmatprep.subr.mxu0 0.0
    %76 = vmatpush1.xpose.msra.mxu0 %v34
    %77 = vmatprep.subr.mxu0 0.0
    %78 = vmatpush1.xpose.msra.mxu0 %v33
    %79 = vmatprep.subr.mxu0 0.0
    %80 = vmatpush1.xpose.msra.mxu0 %v32
    %81 = vmatprep.subr.mxu0 0.0
    %82 = vmatpush1.xpose.msra.mxu0 %v31
    %83 = vmatprep.subr.mxu0 0.0
    %84 = vmatpush1.xpose.msra.mxu0 %v30
    %85 = vmatprep.subr.mxu0 0.0
    %86 = vmatpush1.xpose.msra.mxu0 %v29
    %87 = vmatprep.subr.mxu0 0.0
    %88 = vmatpush1.xpose.msra.mxu0 %v28
    %89 = vmatprep.subr.mxu0 0.0
    %90 = vmatpush1.xpose.msra.mxu0 %v27
    %91 = vmatprep.subr.mxu0 0.0
    %92 = vmatpush2.xpose.msra.mxu0 %v58
    %93 = vmatprep.subr.mxu0 0.0
    %94 = vmatpush2.xpose.msra.mxu0 %v57
    %95 = vmatprep.subr.mxu0 0.0
    %96 = vmatpush2.xpose.msra.mxu0 %v56
    %97 = vmatprep.subr.mxu0 0.0
    %98 = vmatpush2.xpose.msra.mxu0 %v55
    %99 = vmatprep.subr.mxu0 0.0
    %100 = vmatpush2.xpose.msra.mxu0 %v54
    %101 = vmatprep.subr.mxu0 0.0
    %102 = vmatpush2.xpose.msra.mxu0 %v53
    %103 = vmatprep.subr.mxu0 0.0
    %104 = vmatpush2.xpose.msra.mxu0 %v52
    %105 = vmatprep.subr.mxu0 0.0
    %106 = vmatpush2.xpose.msra.mxu0 %v51
    %107 = vmatprep.subr.mxu0 0.0
    %108 = vmatpush2.xpose.msra.mxu0 %v50
    %109 = vmatprep.subr.mxu0 0.0
    %110 = vmatpush2.xpose.msra.mxu0 %v49
    %111 = vmatprep.subr.mxu0 0.0
    %112 = vmatpush2.xpose.msra.mxu0 %v48
    %113 = vmatprep.subr.mxu0 0.0
    %114 = vmatpush2.xpose.msra.mxu0 %v47
    %115 = vmatprep.subr.mxu0 0.0
    %116 = vmatpush2.xpose.msra.mxu0 %v46
    %117 = vmatprep.subr.mxu0 0.0
    %118 = vmatpush2.xpose.msra.mxu0 %v45
    %119 = vmatprep.subr.mxu0 0.0
    %120 = vmatpush2.xpose.msra.mxu0 %v44
    %121 = vmatprep.subr.mxu0 0.0
    %122 = vmatpush2.xpose.msra.mxu0 %v43
    %123 = vmatprep.mubr.f32.mxu0 0.0
    %124 = vmatmul.mubr.f32.gmra.mxu0 %v26
    %v125 = vpop.f32.mrf.mxu0
    %v126 = vadd.f32 0.0, %v125
    %v127 = vpop.f32.mrf.mxu0
    %v128 = vadd.f32 0.0, %v127
    %129 = vdwg.mxu0
    %130 = vst [vmem:[#allocation5] sm:$0xff] %v126
    %131 = vst [vmem:[#allocation5 + $0x8] sm:$0xff] %v128
    // Predicated region
    $region14: #{word2vec_forward.1} parent=1 // pred_check
      _
    $region15: #{word2vec_forward.1} parent=1 // pred_check_branch
      %133 = sbr.rel (0) target = $region17
    $region16: #{word2vec_forward.1} parent=1 // pred_region
      %s135 = ssub.s32 256, 256
      %136 = vsyncadd [#allocation4], %s135
      %s138 = sshll.u32 [#allocation5], 4
      %s139 = int_to_ptr.vmem [resolvable:$true] %s138
      %141 = dma.vmem_to_hbm [thread:$0]  %s139, 256, %s2, [#allocation4]
    $region17: #{word2vec_forward.1} parent=1 // pred_fallthru
      _
    // Predicated region
    $region18: #{word2vec_forward.1} parent=1 // pred_check
      _
    $region19: #{word2vec_forward.1} parent=1 // pred_check_branch
      %143 = sbr.rel (0) target = $region21
    $region20: #{word2vec_forward.1} parent=1 // pred_region
      %144 = dma.done [#allocation4], 256
    $region21: #{word2vec_forward.1} parent=1 // pred_fallthru
      _
    %145 = vsyncpa [#allocation3], 1
    %146 = vsyncpa [#allocation4], 1

</llo_original>
